<compile_context>
chip_gen: v6e
topology: v6e:2x2x1
jax: 0.10.0
libtpu: 0.0.40
codegen_flags: <defaults>
</compile_context>

<pallas_src>
import jax
import jax.numpy as jnp
from jax import lax
from jax.experimental import pallas as pl
from jax.experimental.pallas import tpu as pltpu

C = 16          # fixed by the module: nn.Conv2d(16, 16, 3, padding=1)
KH = KW = 3


def _resblock_kernel(x_ref, w1_ref, b1_ref, w2_ref, b2_ref, out_ref):
    # x_ref  : (B, H, W*C)  lane-dense input slab (also the residual skip)
    # w*_ref : (3, W*C, W*C) block-tridiagonal weights, one matrix per kh tap
    # b*_ref : (1, W*C)      bias tiled across W
    # out_ref: (B, H, W*C)   lane-dense output slab
    B, H, WC = out_ref.shape
    M = B * H

    x = x_ref[...].astype(jnp.float32)      # single load; reused as the skip
    b1 = b1_ref[...]                        # (1, WC) — bias broadcasts hoisted
    b2 = b2_ref[...]
    zero_row = jnp.zeros((B, 1, WC), jnp.float32)

    def band_conv(a, w_ref, bias):
        # out[h] = bias + sum_kh a[h + kh - 1] @ Wband[kh]
        # H borders: zero rows inserted by the shifts below.
        # W borders: handled by the band structure of Wband (no masks needed).
        a_up = jnp.concatenate([zero_row, a[:, :H - 1, :]], axis=1)  # row h <- a[h-1]
        a_dn = jnp.concatenate([a[:, 1:, :], zero_row], axis=1)      # row h <- a[h+1]
        y = jnp.dot(a_up.reshape(M, WC), w_ref[0],
                    preferred_element_type=jnp.float32)
        y += jnp.dot(a.reshape(M, WC), w_ref[1],
                     preferred_element_type=jnp.float32)
        y += jnp.dot(a_dn.reshape(M, WC), w_ref[2],
                     preferred_element_type=jnp.float32)
        return y + bias                                              # (M, WC)

    y1 = jnp.maximum(band_conv(x, w1_ref, b1), 0.0).reshape(B, H, WC)
    y2 = band_conv(y1, w2_ref, b2).reshape(B, H, WC)
    # One unmasked, lane-dense slab store (residual add fused).
    out_ref[...] = (y2 + x).astype(out_ref.dtype)


def _banded_weights(w_hwio, W):
    """(3,3,C,C) HWIO -> (3, W*C, W*C) block-tridiagonal matrices.

    band[kh][wi*C + ci, wo*C + co] = w[kh, wi - wo + 1, ci, co] for |wi-wo| <= 1,
    else 0.  The kw taps and the padding=1 behaviour along W are encoded in the
    band, so the kernel needs no lane shifts or edge masks.
    """
    wi = jnp.arange(W)[None, :, None]
    wo = jnp.arange(W)[None, None, :]
    kw = jnp.arange(KW)[:, None, None]
    sel = (wi == wo + kw - 1).astype(w_hwio.dtype)         # (KW, W, W)
    band = jnp.einsum('kab,hkio->haibo', sel, w_hwio)      # (KH, W, C, W, C)
    return band.reshape(KH, W * C, W * C)


def _choose_grid_steps(N, H, WC, itemsize=4):
    """Per-generation grid sizing: 1 step on single-TC chips, >=2 on v7x."""
    try:
        kind = jax.devices()[0].device_kind.lower()
    except Exception:
        kind = ""
    two_tc = ("v7" in kind) or ("7x" in kind)      # v7x: 2 TensorCores / chip
    min_steps = 2 if (two_tc and N >= 2) else 1
    # VMEM cap: in + out blocks, double-buffered, conservative 8 MiB budget
    # (fits v5e's 16 MiB scoped default and v7x's 32 MiB scoped / 64 MiB phys).
    per_elem = H * WC * itemsize
    b_cap = max(1, (8 << 20) // (4 * per_elem))
    steps = max(min_steps, -(-N // b_cap))
    while N % steps:                               # steps must divide N
        steps += 1
    return steps


def resblock_pallas(x_nchw, w1, b1, w2, b2):
    """x_nchw: (N, 16, H, W) f32. w*: (3,3,16,16) HWIO. b*: (16,)."""
    N, Cin, H, W = x_nchw.shape
    assert Cin == C
    WC = W * C

    # Lane-dense (N, H, W*C) view: the single array the kernel reads (conv
    # input AND residual skip).  NCHW<->lane-dense conversion stays in the
    # wrapper: an in-VMEM (C,H,W)->(H,W*C) transpose would run on a lanes=8
    # layout and cost more than the XLA transpose it replaces.
    x_ld = jnp.transpose(x_nchw, (0, 2, 3, 1)).reshape(N, H, WC)
    w1b = _banded_weights(w1, W)
    w2b = _banded_weights(w2, W)
    b1t = jnp.tile(b1, W).reshape(1, WC)
    b2t = jnp.tile(b2, W).reshape(1, WC)

    steps = _choose_grid_steps(N, H, WC, x_ld.dtype.itemsize)
    B = N // steps

    flops = 2 * 2 * KH * (N * H) * WC * WC          # 6 banded matmuls total
    bytes_accessed = (2 * x_ld.size + w1b.size + w2b.size
                      + b1t.size + b2t.size) * x_ld.dtype.itemsize

    out = pl.pallas_call(
        _resblock_kernel,
        out_shape=jax.ShapeDtypeStruct((N, H, WC), x_ld.dtype),
        grid_spec=pltpu.PrefetchScalarGridSpec(
            num_scalar_prefetch=0,
            grid=(steps,),
            in_specs=[
                pl.BlockSpec((B, H, WC), lambda n: (n, 0, 0)),
                pl.BlockSpec((KH, WC, WC), lambda n: (0, 0, 0)),
                pl.BlockSpec((1, WC), lambda n: (0, 0)),
                pl.BlockSpec((KH, WC, WC), lambda n: (0, 0, 0)),
                pl.BlockSpec((1, WC), lambda n: (0, 0)),
            ],
            out_specs=pl.BlockSpec((B, H, WC), lambda n: (n, 0, 0)),
        ),
        compiler_params=pltpu.CompilerParams(
            dimension_semantics=("parallel",)),
        cost_estimate=pl.CostEstimate(flops=flops, transcendentals=0,
                                      bytes_accessed=bytes_accessed),
    )(x_ld, w1b, b1t, w2b, b2t)

    return jnp.transpose(out.reshape(N, H, W, C), (0, 3, 1, 2))   # back to NCHW


def resblock_ref(x_nchw, w1, b1, w2, b2):
    """Pure-JAX reference (same semantics as the PyTorch forward)."""
    x = jnp.transpose(x_nchw, (0, 2, 3, 1))
    dn = ('NHWC', 'HWIO', 'NHWC')
    y = lax.conv_general_dilated(x, w1, (1, 1), 'SAME',
                                 dimension_numbers=dn) + b1
    y = jnp.maximum(y, 0.0)
    y = lax.conv_general_dilated(y, w2, (1, 1), 'SAME',
                                 dimension_numbers=dn) + b2
    y = y + x
    return jnp.transpose(y, (0, 3, 1, 2))


if __name__ == "__main__":
    key = jax.random.PRNGKey(0)
    kx, kw1, kb1, kw2, kb2 = jax.random.split(key, 5)

    N, H, W = 2, 8, 8          # W*C = 128 -> fully lane-dense slabs
    x = jax.random.normal(kx, (N, C, H, W), dtype=jnp.float32)     # NCHW input
    w1 = jax.random.normal(kw1, (KH, KW, C, C), dtype=jnp.float32) * 0.1
    b1 = jax.random.normal(kb1, (C,), dtype=jnp.float32) * 0.1
    w2 = jax.random.normal(kw2, (KH, KW, C, C), dtype=jnp.float32) * 0.1
    b2 = jax.random.normal(kb2, (C,), dtype=jnp.float32) * 0.1

    out = jax.block_until_ready(resblock_pallas(x, w1, b1, w2, b2))
    ref = jax.block_until_ready(resblock_ref(x, w1, b1, w2, b2))

    assert out.shape == x.shape and out.dtype == x.dtype
    assert jnp.allclose(out, ref, atol=1e-4, rtol=1e-4), "mismatch vs reference"
    print("KERNEL_OK")
</pallas_src>

<mosaic_0001>
module attributes {stable_mosaic.version = 11 : i64} {
  func.func @_resblock_kernel(%arg0: i32, %arg1: memref<2x8x128xf32, #tpu.memory_space<vmem>>, %arg2: memref<3x128x128xf32, #tpu.memory_space<vmem>>, %arg3: memref<1x128xf32, #tpu.memory_space<vmem>>, %arg4: memref<3x128x128xf32, #tpu.memory_space<vmem>>, %arg5: memref<1x128xf32, #tpu.memory_space<vmem>>, %arg6: memref<2x8x128xf32, #tpu.memory_space<vmem>>) attributes {dimension_semantics = [#tpu.dimension_semantics<parallel>], iteration_bounds = array<i64: 1>, scalar_prefetch = 0 : i64, scratch_operands = 0 : i64, tpu.core_type = #tpu.core_type<tc>, window_params = [{transform_indices = @transform_0, window_bounds = array<i64: 2, 8, 128>}, {pipeline_mode = #tpu.pipeline_mode<synchronous>, transform_indices = @transform_1, window_bounds = array<i64: 3, 128, 128>}, {pipeline_mode = #tpu.pipeline_mode<synchronous>, transform_indices = @transform_2, window_bounds = array<i64: 1, 128>}, {pipeline_mode = #tpu.pipeline_mode<synchronous>, transform_indices = @transform_3, window_bounds = array<i64: 3, 128, 128>}, {pipeline_mode = #tpu.pipeline_mode<synchronous>, transform_indices = @transform_4, window_bounds = array<i64: 1, 128>}, {transform_indices = @transform_5, window_bounds = array<i64: 2, 8, 128>}]} {
    %c0 = arith.constant 0 : index
    %c0_0 = arith.constant 0 : index
    %c0_1 = arith.constant 0 : index
    %0 = vector.load %arg1[%c0, %c0_0, %c0_1] : memref<2x8x128xf32, #tpu.memory_space<vmem>>, vector<2x8x128xf32>
    %c0_2 = arith.constant 0 : index
    %c0_3 = arith.constant 0 : index
    %1 = vector.load %arg3[%c0_2, %c0_3] : memref<1x128xf32, #tpu.memory_space<vmem>>, vector<1x128xf32>
    %c0_4 = arith.constant 0 : index
    %c0_5 = arith.constant 0 : index
    %2 = vector.load %arg5[%c0_4, %c0_5] : memref<1x128xf32, #tpu.memory_space<vmem>>, vector<1x128xf32>
    %cst = arith.constant 0.000000e+00 : f32
    %3 = vector.broadcast %cst : f32 to vector<2x1x128xf32>
    %4 = vector.extract_strided_slice %0 {offsets = [0, 0, 0], sizes = [2, 7, 128], strides = [1, 1, 1]} : vector<2x8x128xf32> to vector<2x7x128xf32>
    %5 = tpu.concatenate %3, %4 in 1 : vector<2x1x128xf32>, vector<2x7x128xf32> -> vector<2x8x128xf32>
    %6 = vector.extract_strided_slice %0 {offsets = [0, 1, 0], sizes = [2, 7, 128], strides = [1, 1, 1]} : vector<2x8x128xf32> to vector<2x7x128xf32>
    %7 = tpu.concatenate %6, %3 in 1 : vector<2x7x128xf32>, vector<2x1x128xf32> -> vector<2x8x128xf32>
    %8 = vector.shape_cast %5 : vector<2x8x128xf32> to vector<16x128xf32>
    %c0_6 = arith.constant 0 : index
    %c0_7 = arith.constant 0 : index
    %c0_8 = arith.constant 0 : index
    %9 = vector.load %arg2[%c0_6, %c0_7, %c0_8] : memref<3x128x128xf32, #tpu.memory_space<vmem>>, vector<1x128x128xf32>
    %10 = vector.shape_cast %9 : vector<1x128x128xf32> to vector<128x128xf32>
    %cst_9 = arith.constant dense<0.000000e+00> : vector<16x128xf32>
    %11 = tpu.matmul %8, %10, %cst_9 {dimension_numbers = #tpu.dot_dimension_numbers<[1], [0], [0], [1], [0, 0, 1, 1], [], []>} : vector<16x128xf32>, vector<128x128xf32>, vector<16x128xf32> -> vector<16x128xf32>
    %12 = vector.shape_cast %0 : vector<2x8x128xf32> to vector<16x128xf32>
    %c1 = arith.constant 1 : index
    %c0_10 = arith.constant 0 : index
    %c0_11 = arith.constant 0 : index
    %13 = vector.load %arg2[%c1, %c0_10, %c0_11] : memref<3x128x128xf32, #tpu.memory_space<vmem>>, vector<1x128x128xf32>
    %14 = vector.shape_cast %13 : vector<1x128x128xf32> to vector<128x128xf32>
    %cst_12 = arith.constant dense<0.000000e+00> : vector<16x128xf32>
    %15 = tpu.matmul %12, %14, %cst_12 {dimension_numbers = #tpu.dot_dimension_numbers<[1], [0], [0], [1], [0, 0, 1, 1], [], []>} : vector<16x128xf32>, vector<128x128xf32>, vector<16x128xf32> -> vector<16x128xf32>
    %16 = arith.addf %11, %15 : vector<16x128xf32>
    %17 = vector.shape_cast %7 : vector<2x8x128xf32> to vector<16x128xf32>
    %c2 = arith.constant 2 : index
    %c0_13 = arith.constant 0 : index
    %c0_14 = arith.constant 0 : index
    %18 = vector.load %arg2[%c2, %c0_13, %c0_14] : memref<3x128x128xf32, #tpu.memory_space<vmem>>, vector<1x128x128xf32>
    %19 = vector.shape_cast %18 : vector<1x128x128xf32> to vector<128x128xf32>
    %cst_15 = arith.constant dense<0.000000e+00> : vector<16x128xf32>
    %20 = tpu.matmul %17, %19, %cst_15 {dimension_numbers = #tpu.dot_dimension_numbers<[1], [0], [0], [1], [0, 0, 1, 1], [], []>} : vector<16x128xf32>, vector<128x128xf32>, vector<16x128xf32> -> vector<16x128xf32>
    %21 = arith.addf %16, %20 : vector<16x128xf32>
    %22 = vector.broadcast %1 : vector<1x128xf32> to vector<16x128xf32>
    %23 = arith.addf %21, %22 : vector<16x128xf32>
    %cst_16 = arith.constant 0.000000e+00 : f32
    %24 = vector.broadcast %cst_16 : f32 to vector<16x128xf32>
    %25 = arith.maximumf %23, %24 : vector<16x128xf32>
    %26 = vector.shape_cast %25 : vector<16x128xf32> to vector<2x8x128xf32>
    %27 = vector.extract_strided_slice %26 {offsets = [0, 0, 0], sizes = [2, 7, 128], strides = [1, 1, 1]} : vector<2x8x128xf32> to vector<2x7x128xf32>
    %28 = tpu.concatenate %3, %27 in 1 : vector<2x1x128xf32>, vector<2x7x128xf32> -> vector<2x8x128xf32>
    %29 = vector.extract_strided_slice %26 {offsets = [0, 1, 0], sizes = [2, 7, 128], strides = [1, 1, 1]} : vector<2x8x128xf32> to vector<2x7x128xf32>
    %30 = tpu.concatenate %29, %3 in 1 : vector<2x7x128xf32>, vector<2x1x128xf32> -> vector<2x8x128xf32>
    %31 = vector.shape_cast %28 : vector<2x8x128xf32> to vector<16x128xf32>
    %c0_17 = arith.constant 0 : index
    %c0_18 = arith.constant 0 : index
    %c0_19 = arith.constant 0 : index
    %32 = vector.load %arg4[%c0_17, %c0_18, %c0_19] : memref<3x128x128xf32, #tpu.memory_space<vmem>>, vector<1x128x128xf32>
    %33 = vector.shape_cast %32 : vector<1x128x128xf32> to vector<128x128xf32>
    %cst_20 = arith.constant dense<0.000000e+00> : vector<16x128xf32>
    %34 = tpu.matmul %31, %33, %cst_20 {dimension_numbers = #tpu.dot_dimension_numbers<[1], [0], [0], [1], [0, 0, 1, 1], [], []>} : vector<16x128xf32>, vector<128x128xf32>, vector<16x128xf32> -> vector<16x128xf32>
    %35 = vector.shape_cast %26 : vector<2x8x128xf32> to vector<16x128xf32>
    %c1_21 = arith.constant 1 : index
    %c0_22 = arith.constant 0 : index
    %c0_23 = arith.constant 0 : index
    %36 = vector.load %arg4[%c1_21, %c0_22, %c0_23] : memref<3x128x128xf32, #tpu.memory_space<vmem>>, vector<1x128x128xf32>
    %37 = vector.shape_cast %36 : vector<1x128x128xf32> to vector<128x128xf32>
    %cst_24 = arith.constant dense<0.000000e+00> : vector<16x128xf32>
    %38 = tpu.matmul %35, %37, %cst_24 {dimension_numbers = #tpu.dot_dimension_numbers<[1], [0], [0], [1], [0, 0, 1, 1], [], []>} : vector<16x128xf32>, vector<128x128xf32>, vector<16x128xf32> -> vector<16x128xf32>
    %39 = arith.addf %34, %38 : vector<16x128xf32>
    %40 = vector.shape_cast %30 : vector<2x8x128xf32> to vector<16x128xf32>
    %c2_25 = arith.constant 2 : index
    %c0_26 = arith.constant 0 : index
    %c0_27 = arith.constant 0 : index
    %41 = vector.load %arg4[%c2_25, %c0_26, %c0_27] : memref<3x128x128xf32, #tpu.memory_space<vmem>>, vector<1x128x128xf32>
    %42 = vector.shape_cast %41 : vector<1x128x128xf32> to vector<128x128xf32>
    %cst_28 = arith.constant dense<0.000000e+00> : vector<16x128xf32>
    %43 = tpu.matmul %40, %42, %cst_28 {dimension_numbers = #tpu.dot_dimension_numbers<[1], [0], [0], [1], [0, 0, 1, 1], [], []>} : vector<16x128xf32>, vector<128x128xf32>, vector<16x128xf32> -> vector<16x128xf32>
    %44 = arith.addf %39, %43 : vector<16x128xf32>
    %45 = vector.broadcast %2 : vector<1x128xf32> to vector<16x128xf32>
    %46 = arith.addf %44, %45 : vector<16x128xf32>
    %47 = vector.shape_cast %46 : vector<16x128xf32> to vector<2x8x128xf32>
    %48 = arith.addf %47, %0 : vector<2x8x128xf32>
    %c0_29 = arith.constant 0 : index
    %c0_30 = arith.constant 0 : index
    %c0_31 = arith.constant 0 : index
    %49 = vector.load %arg6[%c0_29, %c0_30, %c0_31] : memref<2x8x128xf32, #tpu.memory_space<vmem>>, vector<2x8x128xf32>
    tpu.vector_store %arg6[%c0_29, %c0_30, %c0_31], %48 {strides = array<i32>} : memref<2x8x128xf32, #tpu.memory_space<vmem>>, vector<2x8x128xf32>,
    return
  }
  func.func @transform_0(%arg0: i32) -> (i32, i32, i32) {
    %c0_i32 = arith.constant 0 : i32
    %c0_i32_0 = arith.constant 0 : i32
    %c0_i32_1 = arith.constant 0 : i32
    return %arg0, %c0_i32, %c0_i32_0 : i32, i32, i32
  }
  func.func @transform_1(%arg0: i32) -> (i32, i32, i32) {
    %c0_i32 = arith.constant 0 : i32
    %c0_i32_0 = arith.constant 0 : i32
    %c0_i32_1 = arith.constant 0 : i32
    %c0_i32_2 = arith.constant 0 : i32
    return %c0_i32, %c0_i32_0, %c0_i32_1 : i32, i32, i32
  }
  func.func @transform_2(%arg0: i32) -> (i32, i32) {
    %c0_i32 = arith.constant 0 : i32
    %c0_i32_0 = arith.constant 0 : i32
    %c0_i32_1 = arith.constant 0 : i32
    return %c0_i32, %c0_i32_0 : i32, i32
  }
  func.func @transform_3(%arg0: i32) -> (i32, i32, i32) {
    %c0_i32 = arith.constant 0 : i32
    %c0_i32_0 = arith.constant 0 : i32
    %c0_i32_1 = arith.constant 0 : i32
    %c0_i32_2 = arith.constant 0 : i32
    return %c0_i32, %c0_i32_0, %c0_i32_1 : i32, i32, i32
  }
  func.func @transform_4(%arg0: i32) -> (i32, i32) {
    %c0_i32 = arith.constant 0 : i32
    %c0_i32_0 = arith.constant 0 : i32
    %c0_i32_1 = arith.constant 0 : i32
    return %c0_i32, %c0_i32_0 : i32, i32
  }
  func.func @transform_5(%arg0: i32) -> (i32, i32, i32) {
    %c0_i32 = arith.constant 0 : i32
    %c0_i32_0 = arith.constant 0 : i32
    %c0_i32_1 = arith.constant 0 : i32
    return %arg0, %c0_i32, %c0_i32_0 : i32, i32, i32
  }
}

</mosaic_0001>

<llo_original>
// kernel: tpu_custom_call.1
$region0: #{tpu_custom_call.1}
  #allocation0 [shape = 'u32[]', space=smem, size = 0x4, offset = 0x4, fixed_abs, tag = 'smem constant byte address 0x4 - core index']
  #allocation1 [shape = 'u32[144,128]{1,0:T(1,128)}', space=vmem, size = 0x12000, scoped, tag = 'internal scratch']
  %s0 = inlined_call_operand.hbm [shape: f32[2,8,128], index: 0, kind: input, shape index: {}]
  %s1 = inlined_call_operand.hbm [shape: f32[3,128,128], index: 1, kind: input, shape index: {}]
  %s2 = inlined_call_operand.vmem [shape: f32[1,128], index: 2, kind: input, shape index: {}]
  %s3 = inlined_call_operand.hbm [shape: f32[3,128,128], index: 3, kind: input, shape index: {}]
  %s4 = inlined_call_operand.vmem [shape: f32[1,128], index: 4, kind: input, shape index: {}]
  %s5 = inlined_call_operand.hbm [shape: f32[2,8,128], index: 5, kind: output, shape index: {}]
  %s6 = sld [smem:[#allocation0]]
  $region42: #{tpu_custom_call.1} parent=0
    _
  %s8 = ssub.s32 1, %s6
  %s9 = scalar_select 0, %s8, %s6
  $region1: #{tpu_custom_call.1} parent=0
    #allocation2 [shape = 'u8[8192]{0}', space=vmem, size = 0x2000, scoped, tag = 'input window, operand 0, single buffered']
    #allocation3 [shape = 's32[1]{0}', space=sflag, size = 0x4, scoped, tag = 'scoped memory for tpu_custom_call.1']
    #allocation4 [shape = 's32[1]{0}', space=sflag, size = 0x4, scoped, tag = 'scoped memory for tpu_custom_call.1']
    #allocation5 [shape = 'u8[196608]{0}', space=vmem, size = 0x30000, scoped, tag = 'input window, operand 1, single buffered']
    #allocation6 [shape = 's32[1]{0}', space=sflag, size = 0x4, scoped, tag = 'scoped memory for tpu_custom_call.1']
    #allocation7 [shape = 'u8[196608]{0}', space=vmem, size = 0x30000, scoped, tag = 'input window, operand 3, single buffered']
    #allocation8 [shape = 'u8[8192]{0}', space=vmem, size = 0x2000, scoped, tag = 'output window, operand 0, single buffered']
    %10 = vsyncpa [#allocation3], 0
    %11 = vsyncpa [#allocation6], 0
    %12 = vsyncpa [#allocation4], 0
    // Predicated region
    $region2: #{tpu_custom_call.1} parent=1 // pred_check
      _
    $region3: #{tpu_custom_call.1} parent=1 // pred_check_branch
      %14 = sbr.rel (0) target = $region5
    $region4: #{tpu_custom_call.1} parent=1 // pred_region
      %s16 = ssub.s32 256, 256
      %17 = vsyncadd [#allocation3], %s16
      %s18 = sshll.u32 [#allocation2], 4
      %s19 = int_to_ptr.vmem [resolvable:$true] %s18
      %24 = dma.hbm_to_vmem [thread:$0]  %s0, 256, %s19, [#allocation3], 128, 128, 8
    $region5: #{tpu_custom_call.1} parent=1 // pred_fallthru
      _
    // Predicated region
    $region6: #{tpu_custom_call.1} parent=1 // pred_check
      _
    $region7: #{tpu_custom_call.1} parent=1 // pred_check_branch
      %26 = sbr.rel (0) target = $region9
    $region8: #{tpu_custom_call.1} parent=1 // pred_region
      %s28 = ssub.s32 6144, 6144
      %29 = vsyncadd [#allocation6], %s28
      %s30 = sshll.u32 [#allocation5], 4
      %s31 = int_to_ptr.vmem [resolvable:$true] %s30
      %36 = dma.hbm_to_vmem [thread:$0]  %s1, 6144, %s31, [#allocation6], 128, 128, 8
    $region9: #{tpu_custom_call.1} parent=1 // pred_fallthru
      _
    // Predicated region
    $region10: #{tpu_custom_call.1} parent=1 // pred_check
      _
    $region11: #{tpu_custom_call.1} parent=1 // pred_check_branch
      %38 = sbr.rel (0) target = $region13
    $region12: #{tpu_custom_call.1} parent=1 // pred_region
      _
    $region13: #{tpu_custom_call.1} parent=1 // pred_fallthru
      _
    // Predicated region
    $region14: #{tpu_custom_call.1} parent=1 // pred_check
      _
    $region15: #{tpu_custom_call.1} parent=1 // pred_check_branch
      %40 = sbr.rel (0) target = $region17
    $region16: #{tpu_custom_call.1} parent=1 // pred_region
      %s42 = ssub.s32 6144, 6144
      %43 = vsyncadd [#allocation6], %s42
      %s44 = sshll.u32 [#allocation7], 4
      %s45 = int_to_ptr.vmem [resolvable:$true] %s44
      %50 = dma.hbm_to_vmem [thread:$0]  %s3, 6144, %s45, [#allocation6], 128, 128, 8
    $region17: #{tpu_custom_call.1} parent=1 // pred_fallthru
      _
    // Predicated region
    $region18: #{tpu_custom_call.1} parent=1 // pred_check
      _
    $region19: #{tpu_custom_call.1} parent=1 // pred_check_branch
      %52 = sbr.rel (0) target = $region21
    $region20: #{tpu_custom_call.1} parent=1 // pred_region
      _
    $region21: #{tpu_custom_call.1} parent=1 // pred_fallthru
      _
    // Predicated region
    $region22: #{tpu_custom_call.1} parent=1 // pred_check
      _
    $region23: #{tpu_custom_call.1} parent=1 // pred_check_branch
      %54 = sbr.rel (0) target = $region25
    $region24: #{tpu_custom_call.1} parent=1 // pred_region
      %55 = dma.done [#allocation3], 256
    $region25: #{tpu_custom_call.1} parent=1 // pred_fallthru
      _
    // Predicated region
    $region26: #{tpu_custom_call.1} parent=1 // pred_check
      _
    $region27: #{tpu_custom_call.1} parent=1 // pred_check_branch
      %57 = sbr.rel (0) target = $region29
    $region28: #{tpu_custom_call.1} parent=1 // pred_region
      %58 = dma.done [#allocation6], 6144
    $region29: #{tpu_custom_call.1} parent=1 // pred_fallthru
      _
    // Predicated region
    $region30: #{tpu_custom_call.1} parent=1 // pred_check
      _
    $region31: #{tpu_custom_call.1} parent=1 // pred_check_branch
      %60 = sbr.rel (0) target = $region33
    $region32: #{tpu_custom_call.1} parent=1 // pred_region
      %61 = dma.done [#allocation6], 6144
    $region33: #{tpu_custom_call.1} parent=1 // pred_fallthru
      _
    %v62 = vld [vmem:[#allocation2] sm:$0xff]
    %v63 = vld [vmem:[#allocation2 + $0x8] sm:$0xff]
    %v64 = vld [vmem:[%s2] sm:$0x1]
    %v65 = vld [vmem:[%s4] sm:$0x1]
    %v68 = vrot.slane %v62, 7
    %v69 = vrot.slane %v63, 7
    %vm72 = vcmask 1040384
    %v73 = vsel %vm72, 0.0, %v68
    %v74 = vsel %vm72, 0.0, %v69
    %v75 = vrot.slane %v62, 1
    %v76 = vrot.slane %v63, 1
    %vm79 = vcmask 1046528
    %v80 = vsel %vm79, %v75, 0.0
    %v81 = vsel %vm79, %v76, 0.0
    %v82 = vld [vmem:[#allocation5] sm:$0xff]
    %v83 = vld [vmem:[#allocation5 + $0x8] sm:$0xff]
    %v84 = vld [vmem:[#allocation5 + $0x10] sm:$0xff]
    %v85 = vld [vmem:[#allocation5 + $0x18] sm:$0xff]
    %v86 = vld [vmem:[#allocation5 + $0x20] sm:$0xff]
    %v87 = vld [vmem:[#allocation5 + $0x28] sm:$0xff]
    %v88 = vld [vmem:[#allocation5 + $0x30] sm:$0xff]
    %v89 = vld [vmem:[#allocation5 + $0x38] sm:$0xff]
    %v90 = vld [vmem:[#allocation5 + $0x40] sm:$0xff]
    %v91 = vld [vmem:[#allocation5 + $0x48] sm:$0xff]
    %v92 = vld [vmem:[#allocation5 + $0x50] sm:$0xff]
    %v93 = vld [vmem:[#allocation5 + $0x58] sm:$0xff]
    %v94 = vld [vmem:[#allocation5 + $0x60] sm:$0xff]
    %v95 = vld [vmem:[#allocation5 + $0x68] sm:$0xff]
    %v96 = vld [vmem:[#allocation5 + $0x70] sm:$0xff]
    %v97 = vld [vmem:[#allocation5 + $0x78] sm:$0xff]
    %s98 = scalar_lea.vmem [#allocation5], 128
    %v99 = vld [vmem:[%s98] sm:$0xff]
    %v100 = vld [vmem:[%s98 + $0x8] sm:$0xff]
    %v101 = vld [vmem:[%s98 + $0x10] sm:$0xff]
    %v102 = vld [vmem:[%s98 + $0x18] sm:$0xff]
    %v103 = vld [vmem:[%s98 + $0x20] sm:$0xff]
    %v104 = vld [vmem:[%s98 + $0x28] sm:$0xff]
    %v105 = vld [vmem:[%s98 + $0x30] sm:$0xff]
    %v106 = vld [vmem:[%s98 + $0x38] sm:$0xff]
    %v107 = vld [vmem:[%s98 + $0x40] sm:$0xff]
    %v108 = vld [vmem:[%s98 + $0x48] sm:$0xff]
    %v109 = vld [vmem:[%s98 + $0x50] sm:$0xff]
    %v110 = vld [vmem:[%s98 + $0x58] sm:$0xff]
    %v111 = vld [vmem:[%s98 + $0x60] sm:$0xff]
    %v112 = vld [vmem:[%s98 + $0x68] sm:$0xff]
    %v113 = vld [vmem:[%s98 + $0x70] sm:$0xff]
    %v114 = vld [vmem:[%s98 + $0x78] sm:$0xff]
    %115 = vmatprep.subr.mxu0 0.0
    %116 = vmatpush1.msra.mxu0 %v114
    %117 = vmatprep.subr.mxu0 0.0
    %118 = vmatpush1.msra.mxu0 %v113
    %119 = vmatprep.subr.mxu0 0.0
    %120 = vmatpush1.msra.mxu0 %v112
    %121 = vmatprep.subr.mxu0 0.0
    %122 = vmatpush1.msra.mxu0 %v111
    %123 = vmatprep.subr.mxu0 0.0
    %124 = vmatpush1.msra.mxu0 %v110
    %125 = vmatprep.subr.mxu0 0.0
    %126 = vmatpush1.msra.mxu0 %v109
    %127 = vmatprep.subr.mxu0 0.0
    %128 = vmatpush1.msra.mxu0 %v108
    %129 = vmatprep.subr.mxu0 0.0
    %130 = vmatpush1.msra.mxu0 %v107
    %131 = vmatprep.subr.mxu0 0.0
    %132 = vmatpush1.msra.mxu0 %v106
    %133 = vmatprep.subr.mxu0 0.0
    %134 = vmatpush1.msra.mxu0 %v105
    %135 = vmatprep.subr.mxu0 0.0
    %136 = vmatpush1.msra.mxu0 %v104
    %137 = vmatprep.subr.mxu0 0.0
    %138 = vmatpush1.msra.mxu0 %v103
    %139 = vmatprep.subr.mxu0 0.0
    %140 = vmatpush1.msra.mxu0 %v102
    %141 = vmatprep.subr.mxu0 0.0
    %142 = vmatpush1.msra.mxu0 %v101
    %143 = vmatprep.subr.mxu0 0.0
    %144 = vmatpush1.msra.mxu0 %v100
    %145 = vmatprep.subr.mxu0 0.0
    %146 = vmatpush1.msra.mxu0 %v99
    %147 = vmatprep.subr.mxu0 0.0
    %148 = vmatpush2.msra.mxu0 0.0
    %149 = vmatprep.subr.mxu0 0.0
    %150 = vmatpush2.msra.mxu0 0.0
    %151 = vmatprep.subr.mxu0 0.0
    %152 = vmatpush2.msra.mxu0 0.0
    %153 = vmatprep.subr.mxu0 0.0
    %154 = vmatpush2.msra.mxu0 0.0
    %155 = vmatprep.subr.mxu0 0.0
    %156 = vmatpush2.msra.mxu0 0.0
    %157 = vmatprep.subr.mxu0 0.0
    %158 = vmatpush2.msra.mxu0 0.0
    %159 = vmatprep.subr.mxu0 0.0
    %160 = vmatpush2.msra.mxu0 0.0
    %161 = vmatprep.subr.mxu0 0.0
    %162 = vmatpush2.msra.mxu0 0.0
    %163 = vmatprep.subr.mxu0 0.0
    %164 = vmatpush2.msra.mxu0 0.0
    %165 = vmatprep.subr.mxu0 0.0
    %166 = vmatpush2.msra.mxu0 0.0
    %167 = vmatprep.subr.mxu0 0.0
    %168 = vmatpush2.msra.mxu0 0.0
    %169 = vmatprep.subr.mxu0 0.0
    %170 = vmatpush2.msra.mxu0 0.0
    %171 = vmatprep.subr.mxu0 0.0
    %172 = vmatpush2.msra.mxu0 0.0
    %173 = vmatprep.subr.mxu0 0.0
    %174 = vmatpush2.msra.mxu0 0.0
    %175 = vmatprep.subr.mxu0 0.0
    %176 = vmatpush2.msra.mxu0 0.0
    %177 = vmatprep.subr.mxu0 0.0
    %178 = vmatpush2.msra.mxu0 0.0
    %179 = vmatprep.mubr.f32.mxu0 0.0
    %180 = vmatmul.mubr.f32.gmra.mxu0 %v62
    %v181 = vpop.f32.mrf.mxu0
    %v182 = vadd.f32 0.0, %v181
    %v183 = vpop.f32.mrf.mxu0
    %184 = vmatprep.mubr.f32.mxu0 0.0
    %185 = vmatmul.mubr.f32.gmra.mxu0 %v63
    %v186 = vpop.f32.mrf.mxu0
    %v187 = vadd.f32 0.0, %v186
    %v188 = vpop.f32.mrf.mxu0
    %189 = vdwg.mxu0
    %190 = vmatprep.subr.mxu0 0.0
    %191 = vmatpush1.msra.mxu0 %v97
    %192 = vmatprep.subr.mxu0 0.0
    %193 = vmatpush1.msra.mxu0 %v96
    %194 = vmatprep.subr.mxu0 0.0
    %195 = vmatpush1.msra.mxu0 %v95
    %196 = vmatprep.subr.mxu0 0.0
    %197 = vmatpush1.msra.mxu0 %v94
    %198 = vmatprep.subr.mxu0 0.0
    %199 = vmatpush1.msra.mxu0 %v93
    %200 = vmatprep.subr.mxu0 0.0
    %201 = vmatpush1.msra.mxu0 %v92
    %202 = vmatprep.subr.mxu0 0.0
    %203 = vmatpush1.msra.mxu0 %v91
    %204 = vmatprep.subr.mxu0 0.0
    %205 = vmatpush1.msra.mxu0 %v90
    %206 = vmatprep.subr.mxu0 0.0
    %207 = vmatpush1.msra.mxu0 %v89
    %208 = vmatprep.subr.mxu0 0.0
    %209 = vmatpush1.msra.mxu0 %v88
    %210 = vmatprep.subr.mxu0 0.0
    %211 = vmatpush1.msra.mxu0 %v87
    %212 = vmatprep.subr.mxu0 0.0
    %213 = vmatpush1.msra.mxu0 %v86
    %214 = vmatprep.subr.mxu0 0.0
    %215 = vmatpush1.msra.mxu0 %v85
    %216 = vmatprep.subr.mxu0 0.0
    %217 = vmatpush1.msra.mxu0 %v84
    %218 = vmatprep.subr.mxu0 0.0
    %219 = vmatpush1.msra.mxu0 %v83
    %220 = vmatprep.subr.mxu0 0.0
    %221 = vmatpush1.msra.mxu0 %v82
    %222 = vmatprep.subr.mxu0 0.0
    %223 = vmatpush2.msra.mxu0 0.0
    %224 = vmatprep.subr.mxu0 0.0
    %225 = vmatpush2.msra.mxu0 0.0
    %226 = vmatprep.subr.mxu0 0.0
    %227 = vmatpush2.msra.mxu0 0.0
    %228 = vmatprep.subr.mxu0 0.0
    %229 = vmatpush2.msra.mxu0 0.0
    %230 = vmatprep.subr.mxu0 0.0
    %231 = vmatpush2.msra.mxu0 0.0
    %232 = vmatprep.subr.mxu0 0.0
    %233 = vmatpush2.msra.mxu0 0.0
    %234 = vmatprep.subr.mxu0 0.0
    %235 = vmatpush2.msra.mxu0 0.0
    %236 = vmatprep.subr.mxu0 0.0
    %237 = vmatpush2.msra.mxu0 0.0
    %238 = vmatprep.subr.mxu0 0.0
    %239 = vmatpush2.msra.mxu0 0.0
    %240 = vmatprep.subr.mxu0 0.0
    %241 = vmatpush2.msra.mxu0 0.0
    %242 = vmatprep.subr.mxu0 0.0
    %243 = vmatpush2.msra.mxu0 0.0
    %244 = vmatprep.subr.mxu0 0.0
    %245 = vmatpush2.msra.mxu0 0.0
    %246 = vmatprep.subr.mxu0 0.0
    %247 = vmatpush2.msra.mxu0 0.0
    %248 = vmatprep.subr.mxu0 0.0
    %249 = vmatpush2.msra.mxu0 0.0
    %250 = vmatprep.subr.mxu0 0.0
    %251 = vmatpush2.msra.mxu0 0.0
    %252 = vmatprep.subr.mxu0 0.0
    %253 = vmatpush2.msra.mxu0 0.0
    %254 = vmatprep.mubr.f32.mxu0 0.0
    %255 = vmatmul.mubr.f32.gmra.mxu0 %v73
    %v256 = vpop.f32.mrf.mxu0
    %v257 = vadd.f32 %v182, %v256
    %v258 = vpop.f32.mrf.mxu0
    %259 = vmatprep.mubr.f32.mxu0 0.0
    %260 = vmatmul.mubr.f32.gmra.mxu0 %v74
    %v261 = vpop.f32.mrf.mxu0
    %v262 = vadd.f32 %v187, %v261
    %v263 = vpop.f32.mrf.mxu0
    %264 = vdwg.mxu0
    %s265 = scalar_lea.vmem [#allocation5], 256
    %v266 = vld [vmem:[%s265] sm:$0xff]
    %v267 = vld [vmem:[%s265 + $0x8] sm:$0xff]
    %v268 = vld [vmem:[%s265 + $0x10] sm:$0xff]
    %v269 = vld [vmem:[%s265 + $0x18] sm:$0xff]
    %v270 = vld [vmem:[%s265 + $0x20] sm:$0xff]
    %v271 = vld [vmem:[%s265 + $0x28] sm:$0xff]
    %v272 = vld [vmem:[%s265 + $0x30] sm:$0xff]
    %v273 = vld [vmem:[%s265 + $0x38] sm:$0xff]
    %v274 = vld [vmem:[%s265 + $0x40] sm:$0xff]
    %v275 = vld [vmem:[%s265 + $0x48] sm:$0xff]
    %v276 = vld [vmem:[%s265 + $0x50] sm:$0xff]
    %v277 = vld [vmem:[%s265 + $0x58] sm:$0xff]
    %v278 = vld [vmem:[%s265 + $0x60] sm:$0xff]
    %v279 = vld [vmem:[%s265 + $0x68] sm:$0xff]
    %v280 = vld [vmem:[%s265 + $0x70] sm:$0xff]
    %v281 = vld [vmem:[%s265 + $0x78] sm:$0xff]
    %282 = vmatprep.subr.mxu0 0.0
    %283 = vmatpush1.msra.mxu0 %v281
    %284 = vmatprep.subr.mxu0 0.0
    %285 = vmatpush1.msra.mxu0 %v280
    %286 = vmatprep.subr.mxu0 0.0
    %287 = vmatpush1.msra.mxu0 %v279
    %288 = vmatprep.subr.mxu0 0.0
    %289 = vmatpush1.msra.mxu0 %v278
    %290 = vmatprep.subr.mxu0 0.0
    %291 = vmatpush1.msra.mxu0 %v277
    %292 = vmatprep.subr.mxu0 0.0
    %293 = vmatpush1.msra.mxu0 %v276
    %294 = vmatprep.subr.mxu0 0.0
    %295 = vmatpush1.msra.mxu0 %v275
    %296 = vmatprep.subr.mxu0 0.0
    %297 = vmatpush1.msra.mxu0 %v274
    %298 = vmatprep.subr.mxu0 0.0
    %299 = vmatpush1.msra.mxu0 %v273
    %300 = vmatprep.subr.mxu0 0.0
    %301 = vmatpush1.msra.mxu0 %v272
    %302 = vmatprep.subr.mxu0 0.0
    %303 = vmatpush1.msra.mxu0 %v271
    %304 = vmatprep.subr.mxu0 0.0
    %305 = vmatpush1.msra.mxu0 %v270
    %306 = vmatprep.subr.mxu0 0.0
    %307 = vmatpush1.msra.mxu0 %v269
    %308 = vmatprep.subr.mxu0 0.0
    %309 = vmatpush1.msra.mxu0 %v268
    %310 = vmatprep.subr.mxu0 0.0
    %311 = vmatpush1.msra.mxu0 %v267
    %312 = vmatprep.subr.mxu0 0.0
    %313 = vmatpush1.msra.mxu0 %v266
    %314 = vmatprep.subr.mxu0 0.0
    %315 = vmatpush2.msra.mxu0 0.0
    %316 = vmatprep.subr.mxu0 0.0
    %317 = vmatpush2.msra.mxu0 0.0
    %318 = vmatprep.subr.mxu0 0.0
    %319 = vmatpush2.msra.mxu0 0.0
    %320 = vmatprep.subr.mxu0 0.0
    %321 = vmatpush2.msra.mxu0 0.0
    %322 = vmatprep.subr.mxu0 0.0
    %323 = vmatpush2.msra.mxu0 0.0
    %324 = vmatprep.subr.mxu0 0.0
    %325 = vmatpush2.msra.mxu0 0.0
    %326 = vmatprep.subr.mxu0 0.0
    %327 = vmatpush2.msra.mxu0 0.0
    %328 = vmatprep.subr.mxu0 0.0
    %329 = vmatpush2.msra.mxu0 0.0
    %330 = vmatprep.subr.mxu0 0.0
    %331 = vmatpush2.msra.mxu0 0.0
    %332 = vmatprep.subr.mxu0 0.0
    %333 = vmatpush2.msra.mxu0 0.0
    %334 = vmatprep.subr.mxu0 0.0
    %335 = vmatpush2.msra.mxu0 0.0
    %336 = vmatprep.subr.mxu0 0.0
    %337 = vmatpush2.msra.mxu0 0.0
    %338 = vmatprep.subr.mxu0 0.0
    %339 = vmatpush2.msra.mxu0 0.0
    %340 = vmatprep.subr.mxu0 0.0
    %341 = vmatpush2.msra.mxu0 0.0
    %342 = vmatprep.subr.mxu0 0.0
    %343 = vmatpush2.msra.mxu0 0.0
    %344 = vmatprep.subr.mxu0 0.0
    %345 = vmatpush2.msra.mxu0 0.0
    %346 = vmatprep.mubr.f32.mxu0 0.0
    %347 = vmatmul.mubr.f32.gmra.mxu0 %v80
    %v348 = vpop.f32.mrf.mxu0
    %v349 = vadd.f32 0.0, %v348
    %v350 = vpop.f32.mrf.mxu0
    %351 = vmatprep.mubr.f32.mxu0 0.0
    %352 = vmatmul.mubr.f32.gmra.mxu0 %v81
    %v353 = vpop.f32.mrf.mxu0
    %v354 = vadd.f32 0.0, %v353
    %v355 = vpop.f32.mrf.mxu0
    %356 = vdwg.mxu0
    %v357 = vadd.f32 %v257, %v349
    %v358 = vadd.f32 %v262, %v354
    %v360 = vlaneseq
    %v361 = vshrl.u32 %v360, 7
    %v362 = vsub.s32 0, %v361
    %v363 = vrot.slane %v64, %v362
    %v365 = vadd.f32 %v357, %v363
    %v366 = vadd.f32 %v358, %v363
    %v367 = vmax.f32 %v365, 0.0
    %v368 = vmax.f32 %v366, 0.0
    %v371 = vrot.slane %v367, 7
    %v372 = vrot.slane %v368, 7
    %v375 = vsel %vm72, 0.0, %v371
    %v376 = vsel %vm72, 0.0, %v372
    %v377 = vrot.slane %v367, 1
    %v378 = vrot.slane %v368, 1
    %v381 = vsel %vm79, %v377, 0.0
    %v382 = vsel %vm79, %v378, 0.0
    %v383 = vld [vmem:[#allocation7] sm:$0xff]
    %v384 = vld [vmem:[#allocation7 + $0x8] sm:$0xff]
    %v385 = vld [vmem:[#allocation7 + $0x10] sm:$0xff]
    %v386 = vld [vmem:[#allocation7 + $0x18] sm:$0xff]
    %v387 = vld [vmem:[#allocation7 + $0x20] sm:$0xff]
    %v388 = vld [vmem:[#allocation7 + $0x28] sm:$0xff]
    %v389 = vld [vmem:[#allocation7 + $0x30] sm:$0xff]
    %v390 = vld [vmem:[#allocation7 + $0x38] sm:$0xff]
    %v391 = vld [vmem:[#allocation7 + $0x40] sm:$0xff]
    %v392 = vld [vmem:[#allocation7 + $0x48] sm:$0xff]
    %v393 = vld [vmem:[#allocation7 + $0x50] sm:$0xff]
    %v394 = vld [vmem:[#allocation7 + $0x58] sm:$0xff]
    %v395 = vld [vmem:[#allocation7 + $0x60] sm:$0xff]
    %v396 = vld [vmem:[#allocation7 + $0x68] sm:$0xff]
    %v397 = vld [vmem:[#allocation7 + $0x70] sm:$0xff]
    %v398 = vld [vmem:[#allocation7 + $0x78] sm:$0xff]
    %s399 = scalar_lea.vmem [#allocation7], 128
    %v400 = vld [vmem:[%s399] sm:$0xff]
    %v401 = vld [vmem:[%s399 + $0x8] sm:$0xff]
    %v402 = vld [vmem:[%s399 + $0x10] sm:$0xff]
    %v403 = vld [vmem:[%s399 + $0x18] sm:$0xff]
    %v404 = vld [vmem:[%s399 + $0x20] sm:$0xff]
    %v405 = vld [vmem:[%s399 + $0x28] sm:$0xff]
    %v406 = vld [vmem:[%s399 + $0x30] sm:$0xff]
    %v407 = vld [vmem:[%s399 + $0x38] sm:$0xff]
    %v408 = vld [vmem:[%s399 + $0x40] sm:$0xff]
    %v409 = vld [vmem:[%s399 + $0x48] sm:$0xff]
    %v410 = vld [vmem:[%s399 + $0x50] sm:$0xff]
    %v411 = vld [vmem:[%s399 + $0x58] sm:$0xff]
    %v412 = vld [vmem:[%s399 + $0x60] sm:$0xff]
    %v413 = vld [vmem:[%s399 + $0x68] sm:$0xff]
    %v414 = vld [vmem:[%s399 + $0x70] sm:$0xff]
    %v415 = vld [vmem:[%s399 + $0x78] sm:$0xff]
    %416 = vmatprep.subr.mxu0 0.0
    %417 = vmatpush1.msra.mxu0 %v415
    %418 = vmatprep.subr.mxu0 0.0
    %419 = vmatpush1.msra.mxu0 %v414
    %420 = vmatprep.subr.mxu0 0.0
    %421 = vmatpush1.msra.mxu0 %v413
    %422 = vmatprep.subr.mxu0 0.0
    %423 = vmatpush1.msra.mxu0 %v412
    %424 = vmatprep.subr.mxu0 0.0
    %425 = vmatpush1.msra.mxu0 %v411
    %426 = vmatprep.subr.mxu0 0.0
    %427 = vmatpush1.msra.mxu0 %v410
    %428 = vmatprep.subr.mxu0 0.0
    %429 = vmatpush1.msra.mxu0 %v409
    %430 = vmatprep.subr.mxu0 0.0
    %431 = vmatpush1.msra.mxu0 %v408
    %432 = vmatprep.subr.mxu0 0.0
    %433 = vmatpush1.msra.mxu0 %v407
    %434 = vmatprep.subr.mxu0 0.0
    %435 = vmatpush1.msra.mxu0 %v406
    %436 = vmatprep.subr.mxu0 0.0
    %437 = vmatpush1.msra.mxu0 %v405
    %438 = vmatprep.subr.mxu0 0.0
    %439 = vmatpush1.msra.mxu0 %v404
    %440 = vmatprep.subr.mxu0 0.0
    %441 = vmatpush1.msra.mxu0 %v403
    %442 = vmatprep.subr.mxu0 0.0
    %443 = vmatpush1.msra.mxu0 %v402
    %444 = vmatprep.subr.mxu0 0.0
    %445 = vmatpush1.msra.mxu0 %v401
    %446 = vmatprep.subr.mxu0 0.0
    %447 = vmatpush1.msra.mxu0 %v400
    %448 = vmatprep.subr.mxu0 0.0
    %449 = vmatpush2.msra.mxu0 0.0
    %450 = vmatprep.subr.mxu0 0.0
    %451 = vmatpush2.msra.mxu0 0.0
    %452 = vmatprep.subr.mxu0 0.0
    %453 = vmatpush2.msra.mxu0 0.0
    %454 = vmatprep.subr.mxu0 0.0
    %455 = vmatpush2.msra.mxu0 0.0
    %456 = vmatprep.subr.mxu0 0.0
    %457 = vmatpush2.msra.mxu0 0.0
    %458 = vmatprep.subr.mxu0 0.0
    %459 = vmatpush2.msra.mxu0 0.0
    %460 = vmatprep.subr.mxu0 0.0
    %461 = vmatpush2.msra.mxu0 0.0
    %462 = vmatprep.subr.mxu0 0.0
    %463 = vmatpush2.msra.mxu0 0.0
    %464 = vmatprep.subr.mxu0 0.0
    %465 = vmatpush2.msra.mxu0 0.0
    %466 = vmatprep.subr.mxu0 0.0
    %467 = vmatpush2.msra.mxu0 0.0
    %468 = vmatprep.subr.mxu0 0.0
    %469 = vmatpush2.msra.mxu0 0.0
    %470 = vmatprep.subr.mxu0 0.0
    %471 = vmatpush2.msra.mxu0 0.0
    %472 = vmatprep.subr.mxu0 0.0
    %473 = vmatpush2.msra.mxu0 0.0
    %474 = vmatprep.subr.mxu0 0.0
    %475 = vmatpush2.msra.mxu0 0.0
    %476 = vmatprep.subr.mxu0 0.0
    %477 = vmatpush2.msra.mxu0 0.0
    %478 = vmatprep.subr.mxu0 0.0
    %479 = vmatpush2.msra.mxu0 0.0
    %480 = vmatprep.mubr.f32.mxu0 0.0
    %481 = vmatmul.mubr.f32.gmra.mxu0 %v367
    %v482 = vpop.f32.mrf.mxu0
    %v483 = vadd.f32 0.0, %v482
    %v484 = vpop.f32.mrf.mxu0
    %485 = vmatprep.mubr.f32.mxu0 0.0
    %486 = vmatmul.mubr.f32.gmra.mxu0 %v368
    %v487 = vpop.f32.mrf.mxu0
    %v488 = vadd.f32 0.0, %v487
    %v489 = vpop.f32.mrf.mxu0
    %490 = vdwg.mxu0
    %491 = vmatprep.subr.mxu0 0.0
    %492 = vmatpush1.msra.mxu0 %v398
    %493 = vmatprep.subr.mxu0 0.0
    %494 = vmatpush1.msra.mxu0 %v397
    %495 = vmatprep.subr.mxu0 0.0
    %496 = vmatpush1.msra.mxu0 %v396
    %497 = vmatprep.subr.mxu0 0.0
    %498 = vmatpush1.msra.mxu0 %v395
    %499 = vmatprep.subr.mxu0 0.0
    %500 = vmatpush1.msra.mxu0 %v394
    %501 = vmatprep.subr.mxu0 0.0
    %502 = vmatpush1.msra.mxu0 %v393
    %503 = vmatprep.subr.mxu0 0.0
    %504 = vmatpush1.msra.mxu0 %v392
    %505 = vmatprep.subr.mxu0 0.0
    %506 = vmatpush1.msra.mxu0 %v391
    %507 = vmatprep.subr.mxu0 0.0
    %508 = vmatpush1.msra.mxu0 %v390
    %509 = vmatprep.subr.mxu0 0.0
    %510 = vmatpush1.msra.mxu0 %v389
    %511 = vmatprep.subr.mxu0 0.0
    %512 = vmatpush1.msra.mxu0 %v388
    %513 = vmatprep.subr.mxu0 0.0
    %514 = vmatpush1.msra.mxu0 %v387
    %515 = vmatprep.subr.mxu0 0.0
    %516 = vmatpush1.msra.mxu0 %v386
    %517 = vmatprep.subr.mxu0 0.0
    %518 = vmatpush1.msra.mxu0 %v385
    %519 = vmatprep.subr.mxu0 0.0
    %520 = vmatpush1.msra.mxu0 %v384
    %521 = vmatprep.subr.mxu0 0.0
    %522 = vmatpush1.msra.mxu0 %v383
    %523 = vmatprep.subr.mxu0 0.0
    %524 = vmatpush2.msra.mxu0 0.0
    %525 = vmatprep.subr.mxu0 0.0
    %526 = vmatpush2.msra.mxu0 0.0
    %527 = vmatprep.subr.mxu0 0.0
    %528 = vmatpush2.msra.mxu0 0.0
    %529 = vmatprep.subr.mxu0 0.0
    %530 = vmatpush2.msra.mxu0 0.0
    %531 = vmatprep.subr.mxu0 0.0
    %532 = vmatpush2.msra.mxu0 0.0
    %533 = vmatprep.subr.mxu0 0.0
    %534 = vmatpush2.msra.mxu0 0.0
    %535 = vmatprep.subr.mxu0 0.0
    %536 = vmatpush2.msra.mxu0 0.0
    %537 = vmatprep.subr.mxu0 0.0
    %538 = vmatpush2.msra.mxu0 0.0
    %539 = vmatprep.subr.mxu0 0.0
    %540 = vmatpush2.msra.mxu0 0.0
    %541 = vmatprep.subr.mxu0 0.0
    %542 = vmatpush2.msra.mxu0 0.0
    %543 = vmatprep.subr.mxu0 0.0
    %544 = vmatpush2.msra.mxu0 0.0
    %545 = vmatprep.subr.mxu0 0.0
    %546 = vmatpush2.msra.mxu0 0.0
    %547 = vmatprep.subr.mxu0 0.0
    %548 = vmatpush2.msra.mxu0 0.0
    %549 = vmatprep.subr.mxu0 0.0
    %550 = vmatpush2.msra.mxu0 0.0
    %551 = vmatprep.subr.mxu0 0.0
    %552 = vmatpush2.msra.mxu0 0.0
    %553 = vmatprep.subr.mxu0 0.0
    %554 = vmatpush2.msra.mxu0 0.0
    %555 = vmatprep.mubr.f32.mxu0 0.0
    %556 = vmatmul.mubr.f32.gmra.mxu0 %v375
    %v557 = vpop.f32.mrf.mxu0
    %v558 = vadd.f32 %v483, %v557
    %v559 = vpop.f32.mrf.mxu0
    %560 = vmatprep.mubr.f32.mxu0 0.0
    %561 = vmatmul.mubr.f32.gmra.mxu0 %v376
    %v562 = vpop.f32.mrf.mxu0
    %v563 = vadd.f32 %v488, %v562
    %v564 = vpop.f32.mrf.mxu0
    %565 = vdwg.mxu0
    %s566 = scalar_lea.vmem [#allocation7], 256
    %v567 = vld [vmem:[%s566] sm:$0xff]
    %v568 = vld [vmem:[%s566 + $0x8] sm:$0xff]
    %v569 = vld [vmem:[%s566 + $0x10] sm:$0xff]
    %v570 = vld [vmem:[%s566 + $0x18] sm:$0xff]
    %v571 = vld [vmem:[%s566 + $0x20] sm:$0xff]
    %v572 = vld [vmem:[%s566 + $0x28] sm:$0xff]
    %v573 = vld [vmem:[%s566 + $0x30] sm:$0xff]
    %v574 = vld [vmem:[%s566 + $0x38] sm:$0xff]
    %v575 = vld [vmem:[%s566 + $0x40] sm:$0xff]
    %v576 = vld [vmem:[%s566 + $0x48] sm:$0xff]
    %v577 = vld [vmem:[%s566 + $0x50] sm:$0xff]
    %v578 = vld [vmem:[%s566 + $0x58] sm:$0xff]
    %v579 = vld [vmem:[%s566 + $0x60] sm:$0xff]
    %v580 = vld [vmem:[%s566 + $0x68] sm:$0xff]
    %v581 = vld [vmem:[%s566 + $0x70] sm:$0xff]
    %v582 = vld [vmem:[%s566 + $0x78] sm:$0xff]
    %583 = vmatprep.subr.mxu0 0.0
    %584 = vmatpush1.msra.mxu0 %v582
    %585 = vmatprep.subr.mxu0 0.0
    %586 = vmatpush1.msra.mxu0 %v581
    %587 = vmatprep.subr.mxu0 0.0
    %588 = vmatpush1.msra.mxu0 %v580
    %589 = vmatprep.subr.mxu0 0.0
    %590 = vmatpush1.msra.mxu0 %v579
    %591 = vmatprep.subr.mxu0 0.0
    %592 = vmatpush1.msra.mxu0 %v578
    %593 = vmatprep.subr.mxu0 0.0
    %594 = vmatpush1.msra.mxu0 %v577
    %595 = vmatprep.subr.mxu0 0.0
    %596 = vmatpush1.msra.mxu0 %v576
    %597 = vmatprep.subr.mxu0 0.0
    %598 = vmatpush1.msra.mxu0 %v575
    %599 = vmatprep.subr.mxu0 0.0
    %600 = vmatpush1.msra.mxu0 %v574
    %601 = vmatprep.subr.mxu0 0.0
    %602 = vmatpush1.msra.mxu0 %v573
    %603 = vmatprep.subr.mxu0 0.0
    %604 = vmatpush1.msra.mxu0 %v572
    %605 = vmatprep.subr.mxu0 0.0
    %606 = vmatpush1.msra.mxu0 %v571
    %607 = vmatprep.subr.mxu0 0.0
    %608 = vmatpush1.msra.mxu0 %v570
    %609 = vmatprep.subr.mxu0 0.0
    %610 = vmatpush1.msra.mxu0 %v569
    %611 = vmatprep.subr.mxu0 0.0
    %612 = vmatpush1.msra.mxu0 %v568
    %613 = vmatprep.subr.mxu0 0.0
    %614 = vmatpush1.msra.mxu0 %v567
    %615 = vmatprep.subr.mxu0 0.0
    %616 = vmatpush2.msra.mxu0 0.0
    %617 = vmatprep.subr.mxu0 0.0
    %618 = vmatpush2.msra.mxu0 0.0
    %619 = vmatprep.subr.mxu0 0.0
    %620 = vmatpush2.msra.mxu0 0.0
    %621 = vmatprep.subr.mxu0 0.0
    %622 = vmatpush2.msra.mxu0 0.0
    %623 = vmatprep.subr.mxu0 0.0
    %624 = vmatpush2.msra.mxu0 0.0
    %625 = vmatprep.subr.mxu0 0.0
    %626 = vmatpush2.msra.mxu0 0.0
    %627 = vmatprep.subr.mxu0 0.0
    %628 = vmatpush2.msra.mxu0 0.0
    %629 = vmatprep.subr.mxu0 0.0
    %630 = vmatpush2.msra.mxu0 0.0
    %631 = vmatprep.subr.mxu0 0.0
    %632 = vmatpush2.msra.mxu0 0.0
    %633 = vmatprep.subr.mxu0 0.0
    %634 = vmatpush2.msra.mxu0 0.0
    %635 = vmatprep.subr.mxu0 0.0
    %636 = vmatpush2.msra.mxu0 0.0
    %637 = vmatprep.subr.mxu0 0.0
    %638 = vmatpush2.msra.mxu0 0.0
    %639 = vmatprep.subr.mxu0 0.0
    %640 = vmatpush2.msra.mxu0 0.0
    %641 = vmatprep.subr.mxu0 0.0
    %642 = vmatpush2.msra.mxu0 0.0
    %643 = vmatprep.subr.mxu0 0.0
    %644 = vmatpush2.msra.mxu0 0.0
    %645 = vmatprep.subr.mxu0 0.0
    %646 = vmatpush2.msra.mxu0 0.0
    %647 = vmatprep.mubr.f32.mxu0 0.0
    %648 = vmatmul.mubr.f32.gmra.mxu0 %v381
    %v649 = vpop.f32.mrf.mxu0
    %v650 = vadd.f32 0.0, %v649
    %v651 = vpop.f32.mrf.mxu0
    %652 = vmatprep.mubr.f32.mxu0 0.0
    %653 = vmatmul.mubr.f32.gmra.mxu0 %v382
    %v654 = vpop.f32.mrf.mxu0
    %v655 = vadd.f32 0.0, %v654
    %v656 = vpop.f32.mrf.mxu0
    %657 = vdwg.mxu0
    %v658 = vadd.f32 %v558, %v650
    %v659 = vadd.f32 %v563, %v655
    %v661 = vlaneseq
    %v662 = vshrl.u32 %v661, 7
    %v663 = vsub.s32 0, %v662
    %v664 = vrot.slane %v65, %v663
    %v666 = vadd.f32 %v658, %v664
    %v667 = vadd.f32 %v659, %v664
    %v668 = vadd.f32 %v666, %v62
    %v669 = vadd.f32 %v667, %v63
    %670 = vst [vmem:[#allocation8] sm:$0xff] %v668
    %671 = vst [vmem:[#allocation8 + $0x8] sm:$0xff] %v669
    // Predicated region
    $region34: #{tpu_custom_call.1} parent=1 // pred_check
      _
    $region35: #{tpu_custom_call.1} parent=1 // pred_check_branch
      %673 = sbr.rel (0) target = $region37
    $region36: #{tpu_custom_call.1} parent=1 // pred_region
      %s675 = ssub.s32 256, 256
      %676 = vsyncadd [#allocation4], %s675
      %s677 = sshll.u32 [#allocation8], 4
      %s678 = int_to_ptr.vmem [resolvable:$true] %s677
      %683 = dma.vmem_to_hbm [thread:$0]  %s678, 256, %s5, [#allocation4], 128, 128, 8
    $region37: #{tpu_custom_call.1} parent=1 // pred_fallthru
      _
    // Predicated region
    $region38: #{tpu_custom_call.1} parent=1 // pred_check
      _
    $region39: #{tpu_custom_call.1} parent=1 // pred_check_branch
      %685 = sbr.rel (0) target = $region41
    $region40: #{tpu_custom_call.1} parent=1 // pred_region
      %686 = dma.done [#allocation4], 256
    $region41: #{tpu_custom_call.1} parent=1 // pred_fallthru
      _
    %687 = vsyncpa [#allocation3], 1
    %688 = vsyncpa [#allocation6], 1
    %689 = vsyncpa [#allocation4], 1

</llo_original>
